<compile_context>
chip_gen: v7x
topology: tpu7x:2x2x1
jax: 0.10.0
libtpu: 0.0.40
codegen_flags: <defaults>
</compile_context>

<pallas_src>
import functools

import jax
import jax.numpy as jnp
from jax.experimental import pallas as pl
from jax.experimental.pallas import tpu as pltpu


def _curlora_kernel(x_ref, wt_ref, xr_ref, ct_ref, b2_ref, o_ref, acc_ref):
    """grid = (M/tm, N/tn, K/tk); axis 2 (K) is the reduction, innermost, 'arbitrary'."""
    k = pl.program_id(2)

    # Base-path partial:  x_k @ W.T_k   -> (tm, tn), f32 accumulation on the MXU.
    partial = jnp.dot(x_ref[...], wt_ref[...], preferred_element_type=jnp.float32)

    @pl.when(k == 0)
    def _first():
        # Direct write on the first K step: saves a full (tm,tn) zero store + reload.
        acc_ref[...] = partial

    @pl.when(k != 0)
    def _accum():
        acc_ref[...] += partial

    @pl.when(k == pl.num_programs(2) - 1)
    def _finalize():
        # Rank-r adapter contribution: delta = (x @ (U@R).T) @ C.T  -> (tm, tn).
        delta = jnp.dot(xr_ref[...], ct_ref[...], preferred_element_type=jnp.float32)
        # (base + bias) + (delta + bias) == base + delta + 2*bias  (b2_ref holds 2*bias).
        o_ref[...] = (acc_ref[...] + delta + b2_ref[...]).astype(o_ref.dtype)


def _fit_tile(dim, target, align):
    """Largest multiple of `align` that is <= target and divides `dim` (falls back to dim)."""
    if dim % align != 0:
        # Awkward dim: fall back to the full extent (fine for small dims; for very
        # large awkward dims consider padding instead — see correctness notes).
        return dim
    t = min(target, dim)
    t = max(align, (t // align) * align)
    while dim % t != 0:
        t -= align
    return t


def _ensure_two_parallel_tiles(M, N, tm, tn, m_align):
    """v7x shards 'parallel' grid axes over 2 TensorCores; keep >= 2 parallel tiles if possible."""
    while (M // tm) * (N // tn) < 2:
        if tn >= 2 * 128 and (tn // 2) % 128 == 0 and N % (tn // 2) == 0:
            tn //= 2
        elif tm >= 2 * m_align and (tm // 2) % m_align == 0 and M % (tm // 2) == 0:
            tm //= 2
        else:
            break
    return tm, tn


def prepare_curlora_params(W, bias, C, R, mxu_dtype=jnp.bfloat16):
    """One-time parameter setup (W, bias, C, R are all frozen in CURLoRA).

    Pre-transposes and pre-casts the big weight so the per-call forward never
    re-streams W through HBM just to transpose/cast it.
    """
    wt = W.T                      # (K, N) — lane-dense output contraction
    ct = C.T                      # (r, N)
    if mxu_dtype is not None:
        wt = jnp.asarray(wt, dtype=mxu_dtype)
        ct = jnp.asarray(ct, dtype=mxu_dtype)
    b2 = (2.0 * bias.astype(jnp.float32)).reshape(1, -1)   # both bias adds folded
    return {"Wt": wt, "Ct": ct, "b2": b2, "R": R}


@functools.partial(jax.jit, static_argnames=("tm", "tn", "tk", "mxu_dtype"))
def curlora_forward(x, Wt, Ct, b2, R, U, *, tm=512, tn=1024, tk=1024,
                    mxu_dtype=jnp.bfloat16):
    """x:(M,K)  Wt:(K,N)  Ct:(r,N)  b2:(1,N)  R:(r,K)  U:(r,r)  ->  (M,N)"""
    M, K = x.shape
    N = Wt.shape[1]
    r = U.shape[0]
    out_dtype = x.dtype

    # Adapter left factor, hoisted out of the kernel (tiny: 2*M*K*r flops, plain XLA).
    rp = (U.astype(jnp.float32) @ R.astype(jnp.float32)).T          # (K, r) == R.T @ U.T
    xr = jnp.dot(x.astype(jnp.float32), rp)                         # (M, r)

    if mxu_dtype is not None:
        x = x.astype(mxu_dtype)
        xr = xr.astype(mxu_dtype)
        Wt = Wt.astype(mxu_dtype)   # no-op when already prepared in mxu_dtype
        Ct = Ct.astype(mxu_dtype)

    # Sublane packing: bf16 packs 16 rows per vreg, f32 packs 8.
    m_align = 8 if jnp.dtype(x.dtype).itemsize >= 4 else 16
    tm = _fit_tile(M, tm, m_align)
    tn = _fit_tile(N, tn, 128)
    tk = _fit_tile(K, tk, 128)
    tm, tn = _ensure_two_parallel_tiles(M, N, tm, tn, m_align)
    grid = (M // tm, N // tn, K // tk)

    # TODO(synk): on v5e (lowest HBM BW, 128 MiB VMEM) a deeper weight-stream
    # buffer (pipeline_mode=pl.Buffered(3) on the Wt spec) and a larger vmem
    # limit can hide exposed DMA latency; 48 MiB is the v7x-safe ceiling here.
    return pl.pallas_call(
        _curlora_kernel,
        out_shape=jax.ShapeDtypeStruct((M, N), out_dtype),
        grid_spec=pltpu.PrefetchScalarGridSpec(
            num_scalar_prefetch=0,
            grid=grid,
            in_specs=[
                pl.BlockSpec((tm, tk), lambda i, j, k: (i, k)),   # x tile
                pl.BlockSpec((tk, tn), lambda i, j, k: (k, j)),   # W.T tile
                pl.BlockSpec((tm, r), lambda i, j, k: (i, 0)),    # XR = x @ (U@R).T
                pl.BlockSpec((r, tn), lambda i, j, k: (0, j)),    # C.T tile
                pl.BlockSpec((1, tn), lambda i, j, k: (0, j)),    # 2*bias tile
            ],
            out_specs=pl.BlockSpec((tm, tn), lambda i, j, k: (i, j)),
            scratch_shapes=[
                pltpu.VMEM((tm, tn), jnp.float32),   # base-path f32 accumulator
            ],
        ),
        compiler_params=pltpu.CompilerParams(
            dimension_semantics=("parallel", "parallel", "arbitrary"),
            vmem_limit_bytes=48 * 1024 * 1024,
        ),
    )(x, Wt, xr, Ct, b2)


def compute_C_and_R(key, W, rank):
    """JAX port of CurloraLayerInner.compute_C_and_R ('inverted_probs' sampling).

    Column/row sampling (torch.multinomial without replacement) is one-time
    parameter setup, not the hot path, so it stays in plain JAX.
    """
    num_rows, num_cols = W.shape
    rank = min(rank, num_rows, num_cols)
    Wf = W.astype(jnp.float32)
    total_norm = jnp.sum(Wf ** 2)
    eps = jnp.asarray(1e-12, jnp.float32)  # guard against all-zero rows/cols

    col_norms = jnp.sum(Wf ** 2, axis=0)
    col_probs = jnp.maximum(col_norms / total_norm, eps)
    inv_col_probs = 1.0 / col_probs
    inv_col_probs = inv_col_probs / inv_col_probs.sum()

    row_norms = jnp.sum(Wf ** 2, axis=1)
    row_probs = jnp.maximum(row_norms / total_norm, eps)
    inv_row_probs = 1.0 / row_probs
    inv_row_probs = inv_row_probs / inv_row_probs.sum()

    k_col, k_row = jax.random.split(key)
    col_indices = jax.random.choice(k_col, num_cols, (rank,), replace=False, p=inv_col_probs)
    row_indices = jax.random.choice(k_row, num_rows, (rank,), replace=False, p=inv_row_probs)

    C = W[:, col_indices]   # (num_rows, rank)
    R = W[row_indices, :]   # (rank, num_cols)
    return C, R


def reference_forward(x, W, bias, C, U, R):
    result = x @ W.T + bias
    W_adapted = C @ U @ R
    output = x @ W_adapted.T + bias
    return result + output


if __name__ == "__main__":
    key = jax.random.PRNGKey(0)
    k_w, k_b, k_x, k_cr, k_u = jax.random.split(key, 5)

    # Small, TPU-friendly shapes consistent with a Linear base layer.
    batch, in_features, out_features, rank = 16, 512, 384, 32

    W = jax.random.normal(k_w, (out_features, in_features), jnp.float32) * 0.05
    bias = jax.random.normal(k_b, (out_features,), jnp.float32) * 0.1
    x = jax.random.normal(k_x, (batch, in_features), jnp.float32)

    C, R = compute_C_and_R(k_cr, W, rank)
    # Module initializes lora_U to zeros; use deterministic non-zero values here
    # so the adapter branch of the kernel is actually exercised.
    U = jax.random.normal(k_u, (C.shape[1], R.shape[0]), jnp.float32) * 0.02

    ref = reference_forward(x, W, bias, C, U, R)

    # 1) f32 MXU path with small tiles: tight semantic check on a (2, 3, 4) grid
    #    that exercises the K-axis accumulation.
    p32 = prepare_curlora_params(W, bias, C, R, mxu_dtype=None)
    out32 = curlora_forward(x, p32["Wt"], p32["Ct"], p32["b2"], p32["R"], U,
                            tm=8, tn=128, tk=128, mxu_dtype=None)
    out32 = jax.block_until_ready(out32)
    assert out32.shape == (batch, out_features)
    assert jnp.allclose(out32, ref, atol=1e-3, rtol=1e-3), "f32 path mismatch vs reference"

    # 2) Production defaults: bf16 MXU inputs, f32 accumulation (looser tolerance
    #    because x/W are cast to bf16 before the MXU).
    params = prepare_curlora_params(W, bias, C, R)           # bf16 weights, cached once
    out = curlora_forward(x, params["Wt"], params["Ct"], params["b2"], params["R"], U)
    out = jax.block_until_ready(out)
    assert out.shape == (batch, out_features)
    assert jnp.allclose(out, ref, atol=8e-2, rtol=5e-2), "bf16 path mismatch vs reference"

    print("KERNEL_OK")
</pallas_src>

<mosaic_0001>
module attributes {stable_mosaic.version = 11 : i64} {
  func.func @_curlora_kernel(%arg0: i32, %arg1: i32, %arg2: i32, %arg3: memref<8x128xf32, #tpu.memory_space<vmem>>, %arg4: memref<128x128xf32, #tpu.memory_space<vmem>>, %arg5: memref<8x32xf32, #tpu.memory_space<vmem>>, %arg6: memref<32x128xf32, #tpu.memory_space<vmem>>, %arg7: memref<1x128xf32, #tpu.memory_space<vmem>>, %arg8: memref<8x128xf32, #tpu.memory_space<vmem>>, %arg9: memref<8x128xf32, #tpu.memory_space<vmem>>) attributes {dimension_semantics = [#tpu.dimension_semantics<parallel>, #tpu.dimension_semantics<parallel>, #tpu.dimension_semantics<arbitrary>], iteration_bounds = array<i64: 2, 3, 4>, scalar_prefetch = 0 : i64, scratch_operands = 1 : i64, tpu.core_type = #tpu.core_type<tc>, window_params = [{transform_indices = @transform_0, window_bounds = array<i64: 8, 128>}, {transform_indices = @transform_1, window_bounds = array<i64: 128, 128>}, {transform_indices = @transform_2, window_bounds = array<i64: 8, 32>}, {transform_indices = @transform_3, window_bounds = array<i64: 32, 128>}, {transform_indices = @transform_4, window_bounds = array<i64: 1, 128>}, {transform_indices = @transform_5, window_bounds = array<i64: 8, 128>}]} {
    %c0 = arith.constant 0 : index
    %c0_0 = arith.constant 0 : index
    %0 = vector.load %arg3[%c0, %c0_0] : memref<8x128xf32, #tpu.memory_space<vmem>>, vector<8x128xf32>
    %c0_1 = arith.constant 0 : index
    %c0_2 = arith.constant 0 : index
    %1 = vector.load %arg4[%c0_1, %c0_2] : memref<128x128xf32, #tpu.memory_space<vmem>>, vector<128x128xf32>
    %cst = arith.constant dense<0.000000e+00> : vector<8x128xf32>
    %2 = tpu.matmul %0, %1, %cst {dimension_numbers = #tpu.dot_dimension_numbers<[1], [0], [0], [1], [0, 0, 1, 1], [], []>} : vector<8x128xf32>, vector<128x128xf32>, vector<8x128xf32> -> vector<8x128xf32>
    %c0_i32 = arith.constant 0 : i32
    %3 = arith.cmpi eq, %arg2, %c0_i32 : i32
    %4 = arith.extui %3 : i1 to i32
    %c0_i32_3 = arith.constant 0 : i32
    %5 = arith.cmpi ne, %4, %c0_i32_3 : i32
    scf.if %5 {
      %c0_7 = arith.constant 0 : index
      %c0_8 = arith.constant 0 : index
      %12 = vector.load %arg9[%c0_7, %c0_8] : memref<8x128xf32, #tpu.memory_space<vmem>>, vector<8x128xf32>
      tpu.vector_store %arg9[%c0_7, %c0_8], %2 {strides = array<i32>} : memref<8x128xf32, #tpu.memory_space<vmem>>, vector<8x128xf32>,
    } else {
    }
    %c0_i32_4 = arith.constant 0 : i32
    %6 = arith.cmpi ne, %arg2, %c0_i32_4 : i32
    %7 = arith.extui %6 : i1 to i32
    %c0_i32_5 = arith.constant 0 : i32
    %8 = arith.cmpi ne, %7, %c0_i32_5 : i32
    scf.if %8 {
      %c0_7 = arith.constant 0 : index
      %c0_8 = arith.constant 0 : index
      %12 = vector.load %arg9[%c0_7, %c0_8] : memref<8x128xf32, #tpu.memory_space<vmem>>, vector<8x128xf32>
      %13 = arith.addf %12, %2 : vector<8x128xf32>
      %c0_9 = arith.constant 0 : index
      %c0_10 = arith.constant 0 : index
      %14 = vector.load %arg9[%c0_9, %c0_10] : memref<8x128xf32, #tpu.memory_space<vmem>>, vector<8x128xf32>
      tpu.vector_store %arg9[%c0_9, %c0_10], %13 {strides = array<i32>} : memref<8x128xf32, #tpu.memory_space<vmem>>, vector<8x128xf32>,
    } else {
    }
    %c3_i32 = arith.constant 3 : i32
    %9 = arith.cmpi eq, %arg2, %c3_i32 : i32
    %10 = arith.extui %9 : i1 to i32
    %c0_i32_6 = arith.constant 0 : i32
    %11 = arith.cmpi ne, %10, %c0_i32_6 : i32
    scf.if %11 {
      %c0_7 = arith.constant 0 : index
      %c0_8 = arith.constant 0 : index
      %12 = vector.load %arg5[%c0_7, %c0_8] : memref<8x32xf32, #tpu.memory_space<vmem>>, vector<8x32xf32>
      %c0_9 = arith.constant 0 : index
      %c0_10 = arith.constant 0 : index
      %13 = vector.load %arg6[%c0_9, %c0_10] : memref<32x128xf32, #tpu.memory_space<vmem>>, vector<32x128xf32>
      %cst_11 = arith.constant dense<0.000000e+00> : vector<8x128xf32>
      %14 = tpu.matmul %12, %13, %cst_11 {dimension_numbers = #tpu.dot_dimension_numbers<[1], [0], [0], [1], [0, 0, 1, 1], [], []>} : vector<8x32xf32>, vector<32x128xf32>, vector<8x128xf32> -> vector<8x128xf32>
      %c0_12 = arith.constant 0 : index
      %c0_13 = arith.constant 0 : index
      %15 = vector.load %arg9[%c0_12, %c0_13] : memref<8x128xf32, #tpu.memory_space<vmem>>, vector<8x128xf32>
      %16 = arith.addf %15, %14 : vector<8x128xf32>
      %c0_14 = arith.constant 0 : index
      %c0_15 = arith.constant 0 : index
      %17 = vector.load %arg7[%c0_14, %c0_15] : memref<1x128xf32, #tpu.memory_space<vmem>>, vector<1x128xf32>
      %18 = vector.broadcast %17 : vector<1x128xf32> to vector<8x128xf32>
      %19 = arith.addf %16, %18 : vector<8x128xf32>
      %c0_16 = arith.constant 0 : index
      %c0_17 = arith.constant 0 : index
      %20 = vector.load %arg8[%c0_16, %c0_17] : memref<8x128xf32, #tpu.memory_space<vmem>>, vector<8x128xf32>
      tpu.vector_store %arg8[%c0_16, %c0_17], %19 {strides = array<i32>} : memref<8x128xf32, #tpu.memory_space<vmem>>, vector<8x128xf32>,
    } else {
    }
    return
  }
  func.func @transform_0(%arg0: i32, %arg1: i32, %arg2: i32) -> (i32, i32) {
    %c0_i32 = arith.constant 0 : i32
    return %arg0, %arg2 : i32, i32
  }
  func.func @transform_1(%arg0: i32, %arg1: i32, %arg2: i32) -> (i32, i32) {
    %c0_i32 = arith.constant 0 : i32
    return %arg2, %arg1 : i32, i32
  }
  func.func @transform_2(%arg0: i32, %arg1: i32, %arg2: i32) -> (i32, i32) {
    %c0_i32 = arith.constant 0 : i32
    %c0_i32_0 = arith.constant 0 : i32
    return %arg0, %c0_i32 : i32, i32
  }
  func.func @transform_3(%arg0: i32, %arg1: i32, %arg2: i32) -> (i32, i32) {
    %c0_i32 = arith.constant 0 : i32
    %c0_i32_0 = arith.constant 0 : i32
    return %c0_i32, %arg1 : i32, i32
  }
  func.func @transform_4(%arg0: i32, %arg1: i32, %arg2: i32) -> (i32, i32) {
    %c0_i32 = arith.constant 0 : i32
    %c0_i32_0 = arith.constant 0 : i32
    return %c0_i32, %arg1 : i32, i32
  }
  func.func @transform_5(%arg0: i32, %arg1: i32, %arg2: i32) -> (i32, i32) {
    %c0_i32 = arith.constant 0 : i32
    return %arg0, %arg1 : i32, i32
  }
}

</mosaic_0001>

<llo_original>
// kernel: curlora_forward.1
$region0: #{curlora_forward.1}
  #allocation0 [shape = 'u32[]', space=smem, size = 0x4, offset = 0x4, fixed_abs, tag = 'smem constant byte address 0x4 - core index']
  #allocation1 [shape = 'u32[144,128]{1,0:T(1,128)}', space=vmem, size = 0x12000, scoped, tag = 'internal scratch']
  #allocation2 [shape = 'f32[8,128]{1,0:T(8,128)}', space=vmem, size = 0x1000, scoped, tag = 'scratch operand']
  %s0 = inlined_call_operand.vmem [shape: f32[16,512], index: 0, kind: input, shape index: {}]
  %s1 = inlined_call_operand.hbm [shape: f32[512,384], index: 1, kind: input, shape index: {}]
  %s2 = inlined_call_operand.vmem [shape: f32[16,32], index: 2, kind: input, shape index: {}]
  %s3 = inlined_call_operand.vmem [shape: f32[32,384], index: 3, kind: input, shape index: {}]
  %s4 = inlined_call_operand.vmem [shape: f32[1,384], index: 4, kind: input, shape index: {}]
  %s5 = inlined_call_operand.hbm [shape: f32[16,384], index: 5, kind: output, shape index: {}]
  %s6 = sld [smem:[#allocation0]]
  $region107: #{curlora_forward.1} parent=0
    _
  %s8 = ssub.s32 1, %s6
  %s9 = scalar_select 0, %s8, %s6
  $region1: #{curlora_forward.1} parent=0
    #allocation3 [shape = 'u8[131072]{0}', space=vmem, size = 0x20000, scoped, tag = 'input window, operand 1']
    #allocation4 [shape = 's32[2]{0}', space=sflag, size = 0x8, scoped, tag = 'scoped memory for curlora_forward.1']
    #allocation5 [shape = 's32[2]{0}', space=sflag, size = 0x8, scoped, tag = 'scoped memory for curlora_forward.1']
    #allocation6 [shape = 'u8[32768]{0}', space=vmem, size = 0x8000, scoped, tag = 'input window, operand 3']
    #allocation7 [shape = 'u8[8192]{0}', space=vmem, size = 0x2000, scoped, tag = 'output window, operand 0']
    %10 = vsyncpa [#allocation4], 0
    %s11 = scalar_lea.sflag [#allocation4], 1
    %12 = vsyncpa %s11, 0
    %13 = vsyncpa [#allocation5], 0
    %s14 = scalar_lea.sflag [#allocation5], 1
    %15 = vsyncpa %s14, 0
    loop: start=0, step=1, limit=26
    $region2: #{curlora_forward.1} parent=1 // loop_pre_header
      _
    $region3: #{curlora_forward.1} parent=1 // loop_header
      %s17 = sphi 0, %s21
      %p18 = scmp.ge.s32.totalorder %s17, 26
      %s24 = sphi 0, %s43
      %s25 = sphi 0, %s39
      %s26 = sphi 0, %s35
      %s27 = sphi 0, %s24
      %s28 = sphi 0, %s25
      %s29 = sphi 0, %s26
      %s30 = sphi 0, %s27
      %s31 = sphi 0, %s28
      %s32 = sphi 0, %s29
      %s48 = sphi 0, %s50
      %s51 = sphi 0, %s48
      %s52 = sphi 0, %s51
      %s68 = sphi 0, %s52
      %s76 = sphi 0, %s78
      %s79 = sphi 0, %s76
      %s80 = sphi 0, %s79
      %s96 = sphi 0, %s80
      %s102 = sphi 0, %s104
      %s105 = sphi 0, %s102
      %s106 = sphi 0, %s105
      %s122 = sphi 0, %s106
      %s128 = sphi 0, %s130
      %s131 = sphi 0, %s128
      %s132 = sphi 0, %s131
      %s148 = sphi 0, %s132
      %s154 = sphi 0, %s156
      %s157 = sphi 0, %s154
      %s158 = sphi 0, %s157
      %s174 = sphi 0, %s158
      %s182 = sphi 0, %s184
      %s185 = sphi 0, %s182
      %s186 = sphi 0, %s185
      %s202 = sphi 0, %s186
    $region4: #{curlora_forward.1} parent=1 // loop_header_branch
      %20 = sbr.rel (%p18) target = $region8
    $region5: #{curlora_forward.1} parent=1 // loop_body
      %s22 = ssub.s32 %s17, 1
      %s23 = ssub.s32 %s17, 2
      %s33 = sadd.s32 1, %s26
      %p34 = scmp.ge.s32.totalorder %s33, 4
      %s35 = scalar_select %p34, 0, %s33
      %s36 = sadd.s32 1, %s25
      %s37 = scalar_select %p34, %s36, %s25
      %p38 = scmp.ge.s32.totalorder %s37, 3
      %s39 = scalar_select %p38, 0, %s37
      %s40 = sadd.s32 1, %s24
      %s41 = scalar_select %p38, %s40, %s24
      %p42 = scmp.ge.s32.totalorder %s41, 2
      %s43 = scalar_select %p42, 0, %s41
      %s44 = ssub.s32 %s24, %s43
      %s45 = ssub.s32 %s26, %s35
      %s46 = sor.u32 %s44, %s45
      %p47 = scmp.eq.s32.totalorder %s46, 0
      %s49 = sadd.s32 %s48, 1
      %s50 = scalar_select %p47, %s48, %s49
      %p53 = pneg %p47
      %p54 = scmp.eq.s32.totalorder %s17, 23
      %p55 = por %p53, %p54
      %p56 = scmp.ne.s32.totalorder %s48, %s51
      %p57 = scmp.eq.s32.totalorder %s17, 0
      %p58 = por %p56, %p57
      %p59 = scmp.ne.s32.totalorder %s48, %s51
      %p60 = scmp.eq.s32.totalorder %s22, 23
      %p61 = por %p59, %p60
      %p62 = scmp.ne.s32.totalorder %s51, %s52
      %p63 = scmp.eq.s32.totalorder %s22, 0
      %p64 = por %p62, %p63
      %p65 = scmp.ne.s32.totalorder %s51, %s52
      %p66 = scmp.eq.s32.totalorder %s23, 23
      %p67 = por %p65, %p66
      %p69 = scmp.ne.s32.totalorder %s52, %s68
      %p70 = scmp.eq.s32.totalorder %s23, 0
      %p71 = por %p69, %p70
      %s72 = ssub.s32 %s26, %s35
      %s73 = ssub.s32 %s25, %s39
      %s74 = sor.u32 %s72, %s73
      %p75 = scmp.eq.s32.totalorder %s74, 0
      %s77 = sadd.s32 %s76, 1
      %s78 = scalar_select %p75, %s76, %s77
      %p81 = pneg %p75
      %p82 = scmp.eq.s32.totalorder %s17, 23
      %p83 = por %p81, %p82
      %p84 = scmp.ne.s32.totalorder %s76, %s79
      %p85 = scmp.eq.s32.totalorder %s17, 0
      %p86 = por %p84, %p85
      %p87 = scmp.ne.s32.totalorder %s76, %s79
      %p88 = scmp.eq.s32.totalorder %s22, 23
      %p89 = por %p87, %p88
      %p90 = scmp.ne.s32.totalorder %s79, %s80
      %p91 = scmp.eq.s32.totalorder %s22, 0
      %p92 = por %p90, %p91
      %p93 = scmp.ne.s32.totalorder %s79, %s80
      %p94 = scmp.eq.s32.totalorder %s23, 23
      %p95 = por %p93, %p94
      %p97 = scmp.ne.s32.totalorder %s80, %s96
      %p98 = scmp.eq.s32.totalorder %s23, 0
      %p99 = por %p97, %p98
      %s100 = ssub.s32 %s24, %s43
      %p101 = scmp.eq.s32.totalorder %s100, 0
      %s103 = sadd.s32 %s102, 1
      %s104 = scalar_select %p101, %s102, %s103
      %p107 = pneg %p101
      %p108 = scmp.eq.s32.totalorder %s17, 23
      %p109 = por %p107, %p108
      %p110 = scmp.ne.s32.totalorder %s102, %s105
      %p111 = scmp.eq.s32.totalorder %s17, 0
      %p112 = por %p110, %p111
      %p113 = scmp.ne.s32.totalorder %s102, %s105
      %p114 = scmp.eq.s32.totalorder %s22, 23
      %p115 = por %p113, %p114
      %p116 = scmp.ne.s32.totalorder %s105, %s106
      %p117 = scmp.eq.s32.totalorder %s22, 0
      %p118 = por %p116, %p117
      %p119 = scmp.ne.s32.totalorder %s105, %s106
      %p120 = scmp.eq.s32.totalorder %s23, 23
      %p121 = por %p119, %p120
      %p123 = scmp.ne.s32.totalorder %s106, %s122
      %p124 = scmp.eq.s32.totalorder %s23, 0
      %p125 = por %p123, %p124
      %s126 = ssub.s32 %s25, %s39
      %p127 = scmp.eq.s32.totalorder %s126, 0
      %s129 = sadd.s32 %s128, 1
      %s130 = scalar_select %p127, %s128, %s129
      %p133 = pneg %p127
      %p134 = scmp.eq.s32.totalorder %s17, 23
      %p135 = por %p133, %p134
      %p136 = scmp.ne.s32.totalorder %s128, %s131
      %p137 = scmp.eq.s32.totalorder %s17, 0
      %p138 = por %p136, %p137
      %p139 = scmp.ne.s32.totalorder %s128, %s131
      %p140 = scmp.eq.s32.totalorder %s22, 23
      %p141 = por %p139, %p140
      %p142 = scmp.ne.s32.totalorder %s131, %s132
      %p143 = scmp.eq.s32.totalorder %s22, 0
      %p144 = por %p142, %p143
      %p145 = scmp.ne.s32.totalorder %s131, %s132
      %p146 = scmp.eq.s32.totalorder %s23, 23
      %p147 = por %p145, %p146
      %p149 = scmp.ne.s32.totalorder %s132, %s148
      %p150 = scmp.eq.s32.totalorder %s23, 0
      %p151 = por %p149, %p150
      %s152 = ssub.s32 %s25, %s39
      %p153 = scmp.eq.s32.totalorder %s152, 0
      %s155 = sadd.s32 %s154, 1
      %s156 = scalar_select %p153, %s154, %s155
      %p159 = pneg %p153
      %p160 = scmp.eq.s32.totalorder %s17, 23
      %p161 = por %p159, %p160
      %p162 = scmp.ne.s32.totalorder %s154, %s157
      %p163 = scmp.eq.s32.totalorder %s17, 0
      %p164 = por %p162, %p163
      %p165 = scmp.ne.s32.totalorder %s154, %s157
      %p166 = scmp.eq.s32.totalorder %s22, 23
      %p167 = por %p165, %p166
      %p168 = scmp.ne.s32.totalorder %s157, %s158
      %p169 = scmp.eq.s32.totalorder %s22, 0
      %p170 = por %p168, %p169
      %p171 = scmp.ne.s32.totalorder %s157, %s158
      %p172 = scmp.eq.s32.totalorder %s23, 23
      %p173 = por %p171, %p172
      %p175 = scmp.ne.s32.totalorder %s158, %s174
      %p176 = scmp.eq.s32.totalorder %s23, 0
      %p177 = por %p175, %p176
      %s178 = ssub.s32 %s24, %s43
      %s179 = ssub.s32 %s25, %s39
      %s180 = sor.u32 %s178, %s179
      %p181 = scmp.eq.s32.totalorder %s180, 0
      %s183 = sadd.s32 %s182, 1
      %s184 = scalar_select %p181, %s182, %s183
      %p187 = pneg %p181
      %p188 = scmp.eq.s32.totalorder %s17, 23
      %p189 = por %p187, %p188
      %p190 = scmp.ne.s32.totalorder %s182, %s185
      %p191 = scmp.eq.s32.totalorder %s17, 0
      %p192 = por %p190, %p191
      %p193 = scmp.ne.s32.totalorder %s182, %s185
      %p194 = scmp.eq.s32.totalorder %s22, 23
      %p195 = por %p193, %p194
      %p196 = scmp.ne.s32.totalorder %s185, %s186
      %p197 = scmp.eq.s32.totalorder %s22, 0
      %p198 = por %p196, %p197
      %p199 = scmp.ne.s32.totalorder %s185, %s186
      %p200 = scmp.eq.s32.totalorder %s23, 23
      %p201 = por %p199, %p200
      %p203 = scmp.ne.s32.totalorder %s186, %s202
      %p204 = scmp.eq.s32.totalorder %s23, 0
      %p205 = por %p203, %p204
      %p206 = scmp.le.s32.totalorder 1, %s17
      %p207 = scmp.lt.s32.totalorder %s17, 25
      %p208 = pnand %p206, %p207
      %p209 = pneg %p208
      // Predicated region
      $region9: #{curlora_forward.1} parent=5 // pred_check
        _
      $region10: #{curlora_forward.1} parent=5 // pred_check_branch
        %211 = sbr.rel (%p208) target = $region12
      $region11: #{curlora_forward.1} parent=5 // pred_region
        %s212 = ssub.s32 %s17, 1
      $region12: #{curlora_forward.1} parent=5 // pred_fallthru
        _
      %p213 = scmp.lt.s32.totalorder %s17, 24
      // Predicated region
      $region13: #{curlora_forward.1} parent=5 // pred_check
        %p214 = pneg %p213
      $region14: #{curlora_forward.1} parent=5 // pred_check_branch
        %216 = sbr.rel (%p214) target = $region16
      $region15: #{curlora_forward.1} parent=5 // pred_region
        // Predicated region
        $region17: #{curlora_forward.1} parent=15 // pred_check
          %p217 = pneg %p58
        $region18: #{curlora_forward.1} parent=15 // pred_check_branch
          %219 = sbr.rel (%p217) target = $region20
        $region19: #{curlora_forward.1} parent=15 // pred_region
          %p220 = scmp.lt.s32.totalorder %s24, 1
          %s221 = scalar_select %p220, %s24, 1
          %p222 = scmp.lt.s32.totalorder %s26, 3
          %s223 = scalar_select %p222, %s26, 3
          %s224 = smul.addr %s221, 4
          %s225 = sadd.s32 %s223, %s224
          %s226 = smul.addr %s225, 8
          %s227 = scalar_lea.vmem %s0, %s226
        $region20: #{curlora_forward.1} parent=15 // pred_fallthru
          _
        // Predicated region
        $region21: #{curlora_forward.1} parent=15 // pred_check
          %p228 = pneg %p86
        $region22: #{curlora_forward.1} parent=15 // pred_check_branch
          %230 = sbr.rel (%p228) target = $region24
        $region23: #{curlora_forward.1} parent=15 // pred_region
          %s231 = sand.u32 %s76, 1
          %s232 = scalar_lea.sflag [#allocation4], %s231
          %s233 = sand.u32 %s76, 1
          %s234 = smul.addr %s233, 128
          %s235 = scalar_lea.vmem [#allocation3], %s234
          %s236 = smul.u32 16, %s26
          %s238 = ssub.s32 2048, 2048
          %239 = vsyncadd %s232, %s238
          %s240 = smul.addr %s236, 3
          %s241 = sadd.s32 %s25, %s240
          %s242 = smul.addr %s241, 128
          %s243 = scalar_lea.hbm %s1, %s242
          %s244 = sshll.u32 %s235, 4
          %s245 = int_to_ptr.vmem [resolvable:$true] %s244
          %250 = dma.hbm_to_vmem [thread:$0]  %s243, 2048, %s245, %s232, 384, 128, 8
        $region24: #{curlora_forward.1} parent=15 // pred_fallthru
          _
        // Predicated region
        $region25: #{curlora_forward.1} parent=15 // pred_check
          %p251 = pneg %p112
        $region26: #{curlora_forward.1} parent=15 // pred_check_branch
          %253 = sbr.rel (%p251) target = $region28
        $region27: #{curlora_forward.1} parent=15 // pred_region
          %p254 = scmp.lt.s32.totalorder %s24, 1
          %s255 = scalar_select %p254, %s24, 1
          %s256 = smul.addr %s255, 8
          %s257 = scalar_lea.vmem %s2, %s256
        $region28: #{curlora_forward.1} parent=15 // pred_fallthru
          _
        // Predicated region
        $region29: #{curlora_forward.1} parent=15 // pred_check
          %p258 = pneg %p138
        $region30: #{curlora_forward.1} parent=15 // pred_check_branch
          %260 = sbr.rel (%p258) target = $region32
        $region31: #{curlora_forward.1} parent=15 // pred_region
          %s261 = sand.u32 %s128, 1
          %s262 = sand.u32 %s128, 1
          %s263 = smul.addr %s262, 32
          %s264 = scalar_lea.vmem [#allocation6], %s263
          %s265 = smul.addr %s25, 8
          %s266 = scalar_lea.vmem %s3, %s265
          // Predicated region
          $region33: #{curlora_forward.1} parent=31 // pred_check
            _
          $region34: #{curlora_forward.1} parent=31 // pred_check_branch
            %268 = sbr.rel (0) target = $region36
          $region35: #{curlora_forward.1} parent=31 // pred_region
            // Predicated region
            $region37: #{curlora_forward.1} parent=35 // pred_check
              _
            $region38: #{curlora_forward.1} parent=35 // pred_check_branch
              %270 = sbr.rel (0) target = $region40
            $region39: #{curlora_forward.1} parent=35 // pred_region
              // Predicated region
              $region52: #{curlora_forward.1} parent=39 // pred_check
                _
              $region53: #{curlora_forward.1} parent=39 // pred_check_branch
                %291 = sbr.rel (0) target = $region55
              $region54: #{curlora_forward.1} parent=39 // pred_region
                loop: start=0, step=1, limit=1
                $region56: #{curlora_forward.1} parent=54 // loop_pre_header
                  _
                $region57: #{curlora_forward.1} parent=54 // loop_header
                  %s293 = sphi 0, %s297
                  %p294 = scmp.ge.s32.totalorder %s293, 1
                  %s298 = sphi %s266, %s266
                  %s299 = sphi %s264, %s264
                $region58: #{curlora_forward.1} parent=54 // loop_header_branch
                  %296 = sbr.rel (%p294) target = $region62
                $region59: #{curlora_forward.1} parent=54 // loop_body
                  %v300 = vld [vmem:[%s298] sm:$0xff]
                  %301 = vst [vmem:[%s299] sm:$0xff] %v300
                  %v302 = vld [vmem:[%s298 + $0x18] sm:$0xff]
                  %303 = vst [vmem:[%s299 + $0x8] sm:$0xff] %v302
                  %v304 = vld [vmem:[%s298 + $0x30] sm:$0xff]
                  %305 = vst [vmem:[%s299 + $0x10] sm:$0xff] %v304
                  %v306 = vld [vmem:[%s298 + $0x48] sm:$0xff]
                  %307 = vst [vmem:[%s299 + $0x18] sm:$0xff] %v306
                $region60: #{curlora_forward.1} parent=54 // loop_footer
                  %s297 = sadd.s32 1, %s293
                $region61: #{curlora_forward.1} parent=54 // loop_footer_branch
                  %292 = sbr.rel target = $region57
                $region62: #{curlora_forward.1} parent=54 // loop_exit
                  _
              $region55: #{curlora_forward.1} parent=39 // pred_fallthru
                _
              // Predicated region
              $region63: #{curlora_forward.1} parent=39 // pred_check
                _
              $region64: #{curlora_forward.1} parent=39 // pred_check_branch
                %309 = sbr.rel target = $region66
              $region65: #{curlora_forward.1} parent=39 // pred_region
                _
              $region66: #{curlora_forward.1} parent=39 // pred_fallthru
                _
            $region40: #{curlora_forward.1} parent=35 // pred_fallthru
              _
            // Predicated region
            $region41: #{curlora_forward.1} parent=35 // pred_check
              _
            $region42: #{curlora_forward.1} parent=35 // pred_check_branch
              %272 = sbr.rel target = $region44
            $region43: #{curlora_forward.1} parent=35 // pred_region
              loop: start=0, step=1, limit=1
              $region45: #{curlora_forward.1} parent=43 // loop_pre_header
                _
              $region46: #{curlora_forward.1} parent=43 // loop_header
                %s275 = sphi 0, %s279
                %p276 = scmp.ge.s32.totalorder %s275, 1
                %s280 = sphi %s266, %s266
                %s281 = sphi %s264, %s264
              $region47: #{curlora_forward.1} parent=43 // loop_header_branch
                %278 = sbr.rel (%p276) target = $region51
              $region48: #{curlora_forward.1} parent=43 // loop_body
                %v282 = vld [vmem:[%s280] sm:$0xff]
                %283 = vst [vmem:[%s281] sm:$0xff] %v282
                %v284 = vld [vmem:[%s280 + $0x18] sm:$0xff]
                %285 = vst [vmem:[%s281 + $0x8] sm:$0xff] %v284
                %v286 = vld [vmem:[%s280 + $0x30] sm:$0xff]
                %287 = vst [vmem:[%s281 + $0x10] sm:$0xff] %v286
                %v288 = vld [vmem:[%s280 + $0x48] sm:$0xff]
                %289 = vst [vmem:[%s281 + $0x18] sm:$0xff] %v288
              $region49: #{curlora_forward.1} parent=43 // loop_footer
                %s279 = sadd.s32 1, %s275
              $region50: #{curlora_forward.1} parent=43 // loop_footer_branch
                %274 = sbr.rel target = $region46
              $region51: #{curlora_forward.1} parent=43 // loop_exit
                _
            $region44: #{curlora_forward.1} parent=35 // pred_fallthru
              _
          $region36: #{curlora_forward.1} parent=31 // pred_fallthru
            _
          %310 = vnop
        $region32: #{curlora_forward.1} parent=15 // pred_fallthru
          _
        // Predicated region
        $region67: #{curlora_forward.1} parent=15 // pred_check
          %p311 = pneg %p164
        $region68: #{curlora_forward.1} parent=15 // pred_check_branch
          %313 = sbr.rel (%p311) target = $region70
        $region69: #{curlora_forward.1} parent=15 // pred_region
          %p314 = scmp.lt.s32.totalorder %s25, 2
          %s315 = scalar_select %p314, %s25, 2
          %s316 = scalar_lea.vmem %s4, %s315
        $region70: #{curlora_forward.1} parent=15 // pred_fallthru
          _
      $region16: #{curlora_forward.1} parent=5 // pred_fallthru
        _
      %p317 = scmp.le.s32.totalorder 1, %s17
      %p318 = scmp.lt.s32.totalorder %s17, 25
      %p319 = pnand %p317, %p318
      %p320 = pneg %p319
      // Predicated region
      $region71: #{curlora_forward.1} parent=5 // pred_check
        _
      $region72: #{curlora_forward.1} parent=5 // pred_check_branch
        %322 = sbr.rel (%p319) target = $region74
      $region73: #{curlora_forward.1} parent=5 // pred_region
        %s323 = ssub.s32 %s17, 1
        %s324 = sand.u32 %s79, 1
        %s325 = scalar_lea.sflag [#allocation4], %s324
        %s326 = sand.u32 %s79, 1
        %s327 = smul.addr %s326, 128
        %s328 = scalar_lea.vmem [#allocation3], %s327
        // Predicated region
        $region75: #{curlora_forward.1} parent=73 // pred_check
          %p329 = pneg %p92
        $region76: #{curlora_forward.1} parent=73 // pred_check_branch
          %331 = sbr.rel (%p329) target = $region78
        $region77: #{curlora_forward.1} parent=73 // pred_region
          %332 = dma.done %s325, 2048
        $region78: #{curlora_forward.1} parent=73 // pred_fallthru
          _
        %s333 = sand.u32 %s131, 1
        %s334 = sand.u32 %s131, 1
        %s335 = smul.addr %s334, 32
        %s336 = scalar_lea.vmem [#allocation6], %s335
        // Predicated region
        $region79: #{curlora_forward.1} parent=73 // pred_check
          %p337 = pneg %p144
        $region80: #{curlora_forward.1} parent=73 // pred_check_branch
          %339 = sbr.rel (%p337) target = $region82
        $region81: #{curlora_forward.1} parent=73 // pred_region
          _
        $region82: #{curlora_forward.1} parent=73 // pred_fallthru
          _
        %p340 = scmp.lt.s32.totalorder %s27, 1
        %s341 = scalar_select %p340, %s27, 1
        %p342 = scmp.lt.s32.totalorder %s29, 3
        %s343 = scalar_select %p342, %s29, 3
        %s344 = smul.addr %s341, 4
        %s345 = sadd.s32 %s343, %s344
        %s346 = smul.addr %s345, 8
        %s347 = scalar_lea.vmem %s0, %s346
        %p348 = pneg %p64
        %p349 = pneg %p61
        %s350 = sand.u32 %s79, 1
        %s351 = scalar_lea.sflag [#allocation4], %s350
        %s352 = sand.u32 %s79, 1
        %s353 = smul.addr %s352, 128
        %s354 = scalar_lea.vmem [#allocation3], %s353
        %p355 = pneg %p92
        %p356 = pneg %p89
        %p357 = scmp.lt.s32.totalorder %s27, 1
        %s358 = scalar_select %p357, %s27, 1
        %s359 = smul.addr %s358, 8
        %s360 = scalar_lea.vmem %s2, %s359
        %p361 = pneg %p118
        %p362 = pneg %p115
        %s363 = sand.u32 %s131, 1
        %s364 = sand.u32 %s131, 1
        %s365 = smul.addr %s364, 32
        %s366 = scalar_lea.vmem [#allocation6], %s365
        %p367 = pneg %p144
        %p368 = pneg %p141
        %p369 = scmp.lt.s32.totalorder %s28, 2
        %s370 = scalar_select %p369, %s28, 2
        %s371 = scalar_lea.vmem %s4, %s370
        %p372 = pneg %p170
        %p373 = pneg %p167
        %p374 = pneg %p198
        %p375 = pneg %p195
        %s376 = sand.u32 %s185, 1
        %s377 = scalar_lea.sflag [#allocation5], %s376
        %s378 = sand.u32 %s185, 1
        %s379 = smul.addr %s378, 8
        %s380 = scalar_lea.vmem [#allocation7], %s379
        %p381 = scmp.lt.s32.totalorder %s27, 1
        %s382 = scalar_select %p381, %s27, 1
        %p383 = scmp.lt.s32.totalorder %s29, 3
        %s384 = scalar_select %p383, %s29, 3
        %s385 = smul.addr %s382, 4
        %s386 = sadd.s32 %s384, %s385
        %s387 = smul.addr %s386, 8
        %s388 = scalar_lea.vmem %s0, %s387
        %s389 = smul.u32 16, %s29
        %p390 = scmp.lt.s32.totalorder %s27, 1
        %s391 = scalar_select %p390, %s27, 1
        %s392 = smul.addr %s391, 8
        %s393 = scalar_lea.vmem %s2, %s392
        %p394 = scmp.lt.s32.totalorder %s28, 2
        %s395 = scalar_select %p394, %s28, 2
        %s396 = scalar_lea.vmem %s4, %s395
        %v397 = vld [vmem:[%s388] sm:$0xff]
        %v398 = vld [vmem:[%s328] sm:$0xff]
        %v399 = vld [vmem:[%s328 + $0x8] sm:$0xff]
        %v400 = vld [vmem:[%s328 + $0x10] sm:$0xff]
        %v401 = vld [vmem:[%s328 + $0x18] sm:$0xff]
        %v402 = vld [vmem:[%s328 + $0x20] sm:$0xff]
        %v403 = vld [vmem:[%s328 + $0x28] sm:$0xff]
        %v404 = vld [vmem:[%s328 + $0x30] sm:$0xff]
        %v405 = vld [vmem:[%s328 + $0x38] sm:$0xff]
        %v406 = vld [vmem:[%s328 + $0x40] sm:$0xff]
        %v407 = vld [vmem:[%s328 + $0x48] sm:$0xff]
        %v408 = vld [vmem:[%s328 + $0x50] sm:$0xff]
        %v409 = vld [vmem:[%s328 + $0x58] sm:$0xff]
        %v410 = vld [vmem:[%s328 + $0x60] sm:$0xff]
        %v411 = vld [vmem:[%s328 + $0x68] sm:$0xff]
        %v412 = vld [vmem:[%s328 + $0x70] sm:$0xff]
        %v413 = vld [vmem:[%s328 + $0x78] sm:$0xff]
        %414 = vmatprep.subr.mxu0 0.0
        %415 = vmatpush1.msra.mxu0 %v398
        %416 = vmatprep.subr.mxu0 0.0
        %417 = vmatpush1.msra.mxu0 %v399
        %418 = vmatprep.subr.mxu0 0.0
        %419 = vmatpush1.msra.mxu0 %v400
        %420 = vmatprep.subr.mxu0 0.0
        %421 = vmatpush1.msra.mxu0 %v401
        %422 = vmatprep.subr.mxu0 0.0
        %423 = vmatpush1.msra.mxu0 %v402
        %424 = vmatprep.subr.mxu0 0.0
        %425 = vmatpush1.msra.mxu0 %v403
        %426 = vmatprep.subr.mxu0 0.0
        %427 = vmatpush1.msra.mxu0 %v404
        %428 = vmatprep.subr.mxu0 0.0
        %429 = vmatpush1.msra.mxu0 %v405
        %430 = vmatprep.subr.mxu0 0.0
        %431 = vmatpush1.msra.mxu0 %v406
        %432 = vmatprep.subr.mxu0 0.0
        %433 = vmatpush1.msra.mxu0 %v407
        %434 = vmatprep.subr.mxu0 0.0
        %435 = vmatpush1.msra.mxu0 %v408
        %436 = vmatprep.subr.mxu0 0.0
        %437 = vmatpush1.msra.mxu0 %v409
        %438 = vmatprep.subr.mxu0 0.0
        %439 = vmatpush1.msra.mxu0 %v410
        %440 = vmatprep.subr.mxu0 0.0
        %441 = vmatpush1.msra.mxu0 %v411
        %442 = vmatprep.subr.mxu0 0.0
        %443 = vmatpush1.msra.mxu0 %v412
        %444 = vmatprep.subr.mxu0 0.0
        %445 = vmatpush1.msra.mxu0 %v413
        %446 = vmatprep.subr.mxu0 0.0
        %447 = vmatpush1.msra.mxu0 0.0
        %448 = vmatprep.subr.mxu0 0.0
        %449 = vmatpush1.msra.mxu0 0.0
        %450 = vmatprep.subr.mxu0 0.0
        %451 = vmatpush1.msra.mxu0 0.0
        %452 = vmatprep.subr.mxu0 0.0
        %453 = vmatpush1.msra.mxu0 0.0
        %454 = vmatprep.subr.mxu0 0.0
        %455 = vmatpush1.msra.mxu0 0.0
        %456 = vmatprep.subr.mxu0 0.0
        %457 = vmatpush1.msra.mxu0 0.0
        %458 = vmatprep.subr.mxu0 0.0
        %459 = vmatpush1.msra.mxu0 0.0
        %460 = vmatprep.subr.mxu0 0.0
        %461 = vmatpush1.msra.mxu0 0.0
        %462 = vmatprep.subr.mxu0 0.0
        %463 = vmatpush1.msra.mxu0 0.0
        %464 = vmatprep.subr.mxu0 0.0
        %465 = vmatpush1.msra.mxu0 0.0
        %466 = vmatprep.subr.mxu0 0.0
        %467 = vmatpush1.msra.mxu0 0.0
        %468 = vmatprep.subr.mxu0 0.0
        %469 = vmatpush1.msra.mxu0 0.0
        %470 = vmatprep.subr.mxu0 0.0
        %471 = vmatpush1.msra.mxu0 0.0
        %472 = vmatprep.subr.mxu0 0.0
        %473 = vmatpush1.msra.mxu0 0.0
        %474 = vmatprep.subr.mxu0 0.0
        %475 = vmatpush1.msra.mxu0 0.0
        %476 = vmatprep.subr.mxu0 0.0
        %477 = vmatpush1.msra.mxu0 0.0
        %478 = vmatprep.mubr.f32.mxu0 0.0
        %479 = vmatmul.mubr.f32.gmra.mrb[0].mxu0 %v397
        %v480 = vpop.f32.mrb[0].mxu0
        %v481 = vadd.f32 0.0, %v480
        %v482 = vpop.f32.mrb[0].mxu0
        %483 = vdwg.mxu0
        %p484 = scmp.eq.s32.totalorder %s29, 0
        // Predicated region
        $region83: #{curlora_forward.1} parent=73 // pred_check
          %p485 = pneg %p484
        $region84: #{curlora_forward.1} parent=73 // pred_check_branch
          %487 = sbr.rel (%p485) target = $region86
        $region85: #{curlora_forward.1} parent=73 // pred_region
          %488 = vst [vmem:[#allocation2] sm:$0xff] %v481
        $region86: #{curlora_forward.1} parent=73 // pred_fallthru
          _
        %p489 = scmp.ne.s32.totalorder %s29, 0
        // Predicated region
        $region87: #{curlora_forward.1} parent=73 // pred_check
          %p490 = pneg %p489
        $region88: #{curlora_forward.1} parent=73 // pred_check_branch
          %492 = sbr.rel (%p490) target = $region90
        $region89: #{curlora_forward.1} parent=73 // pred_region
          %v493 = vld [vmem:[#allocation2] sm:$0xff]
          %v494 = vadd.f32 %v493, %v481
          %495 = vst [vmem:[#allocation2] sm:$0xff] %v494
        $region90: #{curlora_forward.1} parent=73 // pred_fallthru
          _
        %p496 = scmp.eq.s32.totalorder %s29, 3
        // Predicated region
        $region91: #{curlora_forward.1} parent=73 // pred_check
          %p497 = pneg %p496
        $region92: #{curlora_forward.1} parent=73 // pred_check_branch
          %499 = sbr.rel (%p497) target = $region94
        $region93: #{curlora_forward.1} parent=73 // pred_region
          %v500 = vld [vmem:[%s393] sm:$0xff]
          %v501 = vld [vmem:[%s336] sm:$0xff]
          %v502 = vld [vmem:[%s336 + $0x8] sm:$0xff]
          %v503 = vld [vmem:[%s336 + $0x10] sm:$0xff]
          %v504 = vld [vmem:[%s336 + $0x18] sm:$0xff]
          %vm505 = vcmask 261120
          %v507 = vsel %vm505, %v500, 0
          %509 = vmatprep.subr.mxu0 0.0
          %510 = vmatpush1.msra.mxu0 %v501
          %511 = vmatprep.subr.mxu0 0.0
          %512 = vmatpush1.msra.mxu0 %v502
          %513 = vmatprep.subr.mxu0 0.0
          %514 = vmatpush1.msra.mxu0 %v503
          %515 = vmatprep.subr.mxu0 0.0
          %516 = vmatpush1.msra.mxu0 %v504
          %517 = vmatprep.subr.mxu0 0.0
          %518 = vmatpush1.msra.mxu0 0.0
          %519 = vmatprep.subr.mxu0 0.0
          %520 = vmatpush1.msra.mxu0 0.0
          %521 = vmatprep.subr.mxu0 0.0
          %522 = vmatpush1.msra.mxu0 0.0
          %523 = vmatprep.subr.mxu0 0.0
          %524 = vmatpush1.msra.mxu0 0.0
          %525 = vmatprep.subr.mxu0 0.0
          %526 = vmatpush1.msra.mxu0 0.0
          %527 = vmatprep.subr.mxu0 0.0
          %528 = vmatpush1.msra.mxu0 0.0
          %529 = vmatprep.subr.mxu0 0.0
          %530 = vmatpush1.msra.mxu0 0.0
          %531 = vmatprep.subr.mxu0 0.0
          %532 = vmatpush1.msra.mxu0 0.0
          %533 = vmatprep.subr.mxu0 0.0
          %534 = vmatpush1.msra.mxu0 0.0
          %535 = vmatprep.subr.mxu0 0.0
          %536 = vmatpush1.msra.mxu0 0.0
          %537 = vmatprep.subr.mxu0 0.0
          %538 = vmatpush1.msra.mxu0 0.0
          %539 = vmatprep.subr.mxu0 0.0
          %540 = vmatpush1.msra.mxu0 0.0
          %541 = vmatprep.subr.mxu0 0.0
          %542 = vmatpush1.msra.mxu0 0.0
          %543 = vmatprep.subr.mxu0 0.0
          %544 = vmatpush1.msra.mxu0 0.0
          %545 = vmatprep.subr.mxu0 0.0
          %546 = vmatpush1.msra.mxu0 0.0
          %547 = vmatprep.subr.mxu0 0.0
          %548 = vmatpush1.msra.mxu0 0.0
          %549 = vmatprep.subr.mxu0 0.0
          %550 = vmatpush1.msra.mxu0 0.0
          %551 = vmatprep.subr.mxu0 0.0
          %552 = vmatpush1.msra.mxu0 0.0
          %553 = vmatprep.subr.mxu0 0.0
          %554 = vmatpush1.msra.mxu0 0.0
          %555 = vmatprep.subr.mxu0 0.0
          %556 = vmatpush1.msra.mxu0 0.0
          %557 = vmatprep.subr.mxu0 0.0
          %558 = vmatpush1.msra.mxu0 0.0
          %559 = vmatprep.subr.mxu0 0.0
          %560 = vmatpush1.msra.mxu0 0.0
          %561 = vmatprep.subr.mxu0 0.0
          %562 = vmatpush1.msra.mxu0 0.0
          %563 = vmatprep.subr.mxu0 0.0
          %564 = vmatpush1.msra.mxu0 0.0
          %565 = vmatprep.subr.mxu0 0.0
          %566 = vmatpush1.msra.mxu0 0.0
          %567 = vmatprep.subr.mxu0 0.0
          %568 = vmatpush1.msra.mxu0 0.0
          %569 = vmatprep.subr.mxu0 0.0
          %570 = vmatpush1.msra.mxu0 0.0
          %571 = vmatprep.subr.mxu0 0.0
          %572 = vmatpush1.msra.mxu0 0.0
          %573 = vmatprep.mubr.f32.mxu0 0.0
          %574 = vmatmul.mubr.f32.gmra.mrb[0].mxu0 %v507
          %v575 = vpop.f32.mrb[0].mxu0
          %v576 = vadd.f32 0.0, %v575
          %v577 = vpop.f32.mrb[0].mxu0
          %578 = vdwg.mxu0
          %v579 = vld [vmem:[#allocation2] sm:$0xff]
          %v580 = vadd.f32 %v579, %v576
          %v581 = vld [vmem:[%s396] sm:$0x1]
          %v583 = vlaneseq
          %v584 = vshrl.u32 %v583, 7
          %v585 = vsub.s32 0, %v584
          %v586 = vrot.slane %v581, %v585
          %v588 = vadd.f32 %v580, %v586
          %589 = vst [vmem:[%s380] sm:$0xff] %v588
        $region94: #{curlora_forward.1} parent=73 // pred_fallthru
          _
        %s590 = sand.u32 %s185, 1
        %s591 = scalar_lea.sflag [#allocation5], %s590
        %s592 = sand.u32 %s185, 1
        %s593 = smul.addr %s592, 8
        %s594 = scalar_lea.vmem [#allocation7], %s593
        // Predicated region
        $region95: #{curlora_forward.1} parent=73 // pred_check
          %p595 = pneg %p195
        $region96: #{curlora_forward.1} parent=73 // pred_check_branch
          %597 = sbr.rel (%p595) target = $region98
        $region97: #{curlora_forward.1} parent=73 // pred_region
          %s599 = ssub.s32 128, 128
          %600 = vsyncadd %s591, %s599
          %s601 = smul.addr %s27, 3
          %s602 = sadd.s32 %s28, %s601
          %s603 = smul.addr %s602, 128
          %s604 = scalar_lea.hbm %s5, %s603
          %s606 = sshll.u32 %s594, 4
          %s607 = int_to_ptr.vmem [resolvable:$true] %s606
          %609 = dma.vmem_to_hbm [thread:$0]  %s607, 128, %s604, %s591
        $region98: #{curlora_forward.1} parent=73 // pred_fallthru
          _
      $region74: #{curlora_forward.1} parent=5 // pred_fallthru
        _
      %p610 = scmp.le.s32.totalorder 2, %s17
      // Predicated region
      $region99: #{curlora_forward.1} parent=5 // pred_check
        %p611 = pneg %p610
      $region100: #{curlora_forward.1} parent=5 // pred_check_branch
        %613 = sbr.rel (%p611) target = $region102
      $region101: #{curlora_forward.1} parent=5 // pred_region
        %s614 = ssub.s32 %s17, 2
        // Predicated region
        $region103: #{curlora_forward.1} parent=101 // pred_check
          %p615 = pneg %p201
        $region104: #{curlora_forward.1} parent=101 // pred_check_branch
          %617 = sbr.rel (%p615) target = $region106
        $region105: #{curlora_forward.1} parent=101 // pred_region
          %s618 = sand.u32 %s186, 1
          %s619 = scalar_lea.sflag [#allocation5], %s618
          %s620 = sand.u32 %s186, 1
          %s621 = smul.addr %s620, 8
          %s622 = scalar_lea.vmem [#allocation7], %s621
          %623 = dma.done %s619, 128
        $region106: #{curlora_forward.1} parent=101 // pred_fallthru
          _
      $region102: #{curlora_forward.1} parent=5 // pred_fallthru
        _
    $region6: #{curlora_forward.1} parent=1 // loop_footer
      %s21 = sadd.s32 1, %s17
    $region7: #{curlora_forward.1} parent=1 // loop_footer_branch
      %16 = sbr.rel target = $region3
    $region8: #{curlora_forward.1} parent=1 // loop_exit
      _
    %624 = vsyncpa [#allocation4], 1
    %s625 = scalar_lea.sflag [#allocation4], 1
    %626 = vsyncpa %s625, 1
    %627 = vsyncpa [#allocation5], 1
    %s628 = scalar_lea.sflag [#allocation5], 1
    %629 = vsyncpa %s628, 1

</llo_original>
